<compile_context>
chip_gen: v7x
topology: tpu7x:2x2x1
jax: 0.10.0
libtpu: 0.0.40
codegen_flags: <defaults>
</compile_context>

<pallas_src>
import functools

import jax
import jax.numpy as jnp
import numpy as np
from jax.experimental import pallas as pl
from jax.experimental.pallas import tpu as pltpu


def _round_up(a, m):
    return (a + m - 1) // m * m


def _vmem_budget_bytes():
    """~78% of per-core VMEM: headroom for Mosaic internal scratch / descriptors."""
    try:
        cap = int(pltpu.get_tpu_info().vmem_capacity_bytes)
    except Exception:
        cap = 64 * 1024 * 1024  # conservative fallback (v7x-sized per-TC VMEM)
    return int(0.78 * cap)


def _block_spec(shape, index_map, pipeline_mode=None):
    """BlockSpec with optional pipeline_mode; falls back cleanly if unsupported."""
    if pipeline_mode is not None:
        try:
            return pl.BlockSpec(shape, index_map, pipeline_mode=pipeline_mode)
        except TypeError:
            pass
    return pl.BlockSpec(shape, index_map)


def _bias_gelu(h32, b1_row, *, elementwise_dtype, approximate, out_dtype):
    """Bias add + GELU in `elementwise_dtype`, result cast to `out_dtype` (MXU input)."""
    h = h32.astype(elementwise_dtype) + b1_row.astype(elementwise_dtype)
    h = jax.nn.gelu(h, approximate=approximate)
    return h.astype(out_dtype)


def _ff_fused_kernel(x_ref, w1_ref, b1_ref, w2_ref, b2_ref, o_ref, *,
                     compute_dtype, elementwise_dtype, approximate_gelu):
    """One (TM, D) row tile; full hidden dim resident (no accumulator needed)."""
    x = x_ref[...].astype(compute_dtype)
    h32 = jnp.dot(x, w1_ref[...], preferred_element_type=jnp.float32)
    h = _bias_gelu(h32, b1_ref[...], elementwise_dtype=elementwise_dtype,
                   approximate=approximate_gelu, out_dtype=compute_dtype)
    y = jnp.dot(h, w2_ref[...], preferred_element_type=jnp.float32)
    o_ref[...] = (y + b2_ref[...]).astype(o_ref.dtype)


def _ff_blocked_kernel(x_ref, w1_ref, b1_ref, w2_ref, b2_ref, o_ref,
                       xc_ref, acc_ref, *,
                       compute_dtype, elementwise_dtype, approximate_gelu):
    """One (TM, D) row tile x one (TH) hidden block; f32 accumulator across H blocks."""
    h_idx = pl.program_id(1)

    @pl.when(h_idx == 0)
    def _init():
        acc_ref[...] = jnp.zeros_like(acc_ref)
        # Cast the x tile to the MXU dtype once per row tile, not once per H step.
        xc_ref[...] = x_ref[...].astype(xc_ref.dtype)

    h32 = jnp.dot(xc_ref[...], w1_ref[...], preferred_element_type=jnp.float32)
    h = _bias_gelu(h32, b1_ref[...], elementwise_dtype=elementwise_dtype,
                   approximate=approximate_gelu, out_dtype=compute_dtype)
    acc_ref[...] += jnp.dot(h, w2_ref[...], preferred_element_type=jnp.float32)

    @pl.when(h_idx == pl.num_programs(1) - 1)
    def _finalize():
        o_ref[...] = (acc_ref[...] + b2_ref[...]).astype(o_ref.dtype)


def chunk_feedforward(x, w1, b1, w2, b2, *, chunks, bucket_size=None,
                      tm=512, th=None, compute_dtype=jnp.bfloat16,
                      elementwise_dtype=jnp.float32,
                      approximate_gelu=True, out_dtype=None,
                      force_hidden_blocking=False):
    """Pallas implementation of Chunk(chunks, FeedForward, along_dim=1).forward(x, bucket_size).

    `chunks` / `bucket_size` are accepted for API parity with the PyTorch module but
    do not affect the result (the FF is position-wise); tiling is chosen purely for
    the hardware.  Performance defaults: bf16 MXU inputs, f32 accumulation, tanh GELU.
    Strict torch parity: compute_dtype=float32, approximate_gelu=False.
    """
    del chunks, bucket_size  # forward() never passes bucket_size to fn; chunking is a numeric no-op
    B, N, D = x.shape
    Din, H = w1.shape
    assert Din == D and w2.shape == (H, D) and b1.shape == (H,) and b2.shape == (D,)

    out_dtype = x.dtype if out_dtype is None else out_dtype
    R = B * N
    x2 = x.reshape(R, D)

    cbytes = np.dtype(compute_dtype).itemsize
    xbytes = np.dtype(x.dtype).itemsize
    obytes = np.dtype(out_dtype).itemsize
    budget = _vmem_budget_bytes()
    headroom = 1.15

    # Weights in the MXU compute dtype (halves weight DMA for bf16); biases stay f32.
    w1c = w1.astype(compute_dtype)
    w2c = w2.astype(compute_dtype)
    b1f = b1.reshape(1, H).astype(jnp.float32)
    b2f = b2.reshape(1, D).astype(jnp.float32)

    H_pad_full = _round_up(H, 128)

    def _row_cap(tm_req):
        # Keep >=2 row tiles when possible so the "parallel" axis shards across
        # v7x's two TensorCores; lane dim (D) stays dense, sublane multiple of 8.
        cap = _round_up(R, 8)
        if R >= 16:
            cap = min(cap, _round_up(-(-R // 2), 8))
        return max(8, min(_round_up(max(int(tm_req), 8), 8), cap))

    # ---------------------------------------------------------------- fused path
    if not force_hidden_blocking:
        Hp = H_pad_full
        weight_bytes = 2 * D * Hp * cbytes          # W1 + W2, single-buffered (Buffered(1))
        bias_bytes = 2 * (Hp + D) * 4
        fixed = (weight_bytes + bias_bytes) * headroom
        per_row = (2 * D * xbytes + 2 * D * obytes  # double-buffered in/out tiles
                   + Hp * (4 + cbytes)) * headroom  # f32 hidden + compute-dtype copy
        if fixed + 8 * per_row <= budget:
            tm_fit = int((budget - fixed) // per_row) // 8 * 8
            tm_eff = _row_cap(min(int(tm), tm_fit))

            if Hp != H:
                w1c = jnp.pad(w1c, ((0, 0), (0, Hp - H)))
                b1f = jnp.pad(b1f, ((0, 0), (0, Hp - H)))
                w2c = jnp.pad(w2c, ((0, Hp - H), (0, 0)))
            R_pad = _round_up(R, tm_eff)
            x2p = jnp.pad(x2, ((0, R_pad - R), (0, 0))) if R_pad != R else x2
            n_rows = R_pad // tm_eff

            vmem_est = int(fixed + tm_eff * per_row)
            vmem_limit = int(min(max(int(1.3 * vmem_est), 32 * 1024 * 1024), budget))

            kernel = functools.partial(_ff_fused_kernel,
                                       compute_dtype=compute_dtype,
                                       elementwise_dtype=elementwise_dtype,
                                       approximate_gelu=approximate_gelu)
            resident = pl.Buffered(1)  # constant index map -> one copy, DMA'd once

            out2 = pl.pallas_call(
                kernel,
                out_shape=jax.ShapeDtypeStruct((R_pad, D), out_dtype),
                grid_spec=pltpu.PrefetchScalarGridSpec(
                    num_scalar_prefetch=0,
                    grid=(n_rows,),
                    in_specs=[
                        pl.BlockSpec((tm_eff, D), lambda i: (i, 0)),              # x row tile
                        _block_spec((D, Hp), lambda i: (0, 0), resident),          # W1 resident
                        pl.BlockSpec((1, Hp), lambda i: (0, 0)),                   # b1
                        _block_spec((Hp, D), lambda i: (0, 0), resident),          # W2 resident
                        pl.BlockSpec((1, D), lambda i: (0, 0)),                    # b2
                    ],
                    out_specs=pl.BlockSpec((tm_eff, D), lambda i: (i, 0)),
                ),
                compiler_params=pltpu.CompilerParams(
                    dimension_semantics=("parallel",),
                    vmem_limit_bytes=vmem_limit,
                ),
            )(x2p, w1c, b1f, w2c, b2f)

            if R_pad != R:
                out2 = out2[:R]
            return out2.reshape(B, N, D)

    # -------------------------------------------------------------- blocked path
    # Hidden (lane) blocking: zero-padding H is exact (gelu(0+0)=0 and padded W2
    # rows are zero).  Weight slices are re-streamed per row tile, so TM must be
    # large enough to stay MXU-bound (>= ~700 flop/byte on v6e).
    if th is None:
        th_eff = max(256, _round_up(min(H_pad_full, 1024), 256))   # 256-multiples for v6e/v7x MXU
    else:
        th_eff = max(128, _round_up(min(int(th), H_pad_full), 128))
    H_pad = _round_up(H, th_eff)

    tm_req = max(int(tm), 768)
    fixed = (2 * 2 * D * th_eff * cbytes + 2 * (th_eff + D) * 4) * headroom
    per_row = (2 * D * xbytes + 2 * D * obytes       # double-buffered in/out tiles
               + D * cbytes + D * 4                  # x cache scratch + f32 accumulator
               + th_eff * (4 + cbytes)) * headroom   # f32 hidden + compute-dtype copy
    tm_fit = max(8, int(max(budget - fixed, 0) // per_row) // 8 * 8)
    tm_eff = _row_cap(min(tm_req, tm_fit))

    R_pad = _round_up(R, tm_eff)
    x2p = jnp.pad(x2, ((0, R_pad - R), (0, 0))) if R_pad != R else x2
    if H_pad != H:
        w1c = jnp.pad(w1c, ((0, 0), (0, H_pad - H)))
        b1f = jnp.pad(b1f, ((0, 0), (0, H_pad - H)))
        w2c = jnp.pad(w2c, ((0, H_pad - H), (0, 0)))
    n_rows = R_pad // tm_eff
    n_h = H_pad // th_eff

    vmem_est = int(fixed + tm_eff * per_row)
    vmem_limit = int(min(max(int(1.3 * vmem_est), 32 * 1024 * 1024), budget))

    kernel = functools.partial(_ff_blocked_kernel,
                               compute_dtype=compute_dtype,
                               elementwise_dtype=elementwise_dtype,
                               approximate_gelu=approximate_gelu)

    out2 = pl.pallas_call(
        kernel,
        out_shape=jax.ShapeDtypeStruct((R_pad, D), out_dtype),
        grid_spec=pltpu.PrefetchScalarGridSpec(
            num_scalar_prefetch=0,
            grid=(n_rows, n_h),
            in_specs=[
                pl.BlockSpec((tm_eff, D), lambda i, h: (i, 0)),   # x row tile (lane-dense D)
                pl.BlockSpec((D, th_eff), lambda i, h: (0, h)),   # W1 hidden slice
                pl.BlockSpec((1, th_eff), lambda i, h: (0, h)),   # b1 hidden slice
                pl.BlockSpec((th_eff, D), lambda i, h: (h, 0)),   # W2 hidden slice
                pl.BlockSpec((1, D), lambda i, h: (0, 0)),        # b2 (constant block)
            ],
            out_specs=pl.BlockSpec((tm_eff, D), lambda i, h: (i, 0)),
            scratch_shapes=[pltpu.VMEM((tm_eff, D), compute_dtype),  # cached x tile
                            pltpu.VMEM((tm_eff, D), jnp.float32)],   # f32 accumulator
        ),
        compiler_params=pltpu.CompilerParams(
            dimension_semantics=("parallel", "arbitrary"),
            vmem_limit_bytes=vmem_limit,
        ),
    )(x2p, w1c, b1f, w2c, b2f)

    if R_pad != R:
        out2 = out2[:R]
    return out2.reshape(B, N, D)


def _reference(x, w1, b1, w2, b2, *, chunks):
    # Pure-JAX mirror of the PyTorch forward: chunk -> fn -> cat along dim=1.
    parts = jnp.array_split(x, chunks, axis=1)
    outs = []
    for c in parts:
        h = jax.nn.gelu(c @ w1 + b1, approximate=False)
        outs.append(h @ w2 + b2)
    return jnp.concatenate(outs, axis=1)


if __name__ == "__main__":
    # Small shapes consistent with the module, lane-dense (D, H multiples of 128).
    B, N, D, H = 2, 64, 128, 256
    CHUNKS = 4
    BUCKET_SIZE = 16  # accepted by forward(), unused by fn -- same as the PyTorch module

    key = jax.random.PRNGKey(0)
    kx, kw1, kb1, kw2, kb2 = jax.random.split(key, 5)

    x = jax.random.normal(kx, (B, N, D), dtype=jnp.float32)
    w1 = jax.random.normal(kw1, (D, H), dtype=jnp.float32) * (1.0 / jnp.sqrt(D))
    b1 = jax.random.normal(kb1, (H,), dtype=jnp.float32) * 0.01
    w2 = jax.random.normal(kw2, (H, D), dtype=jnp.float32) * (1.0 / jnp.sqrt(H))
    b2 = jax.random.normal(kb2, (D,), dtype=jnp.float32) * 0.01

    ref = _reference(x, w1, b1, w2, b2, chunks=CHUNKS)

    fn = jax.jit(chunk_feedforward,
                 static_argnames=("chunks", "bucket_size", "tm", "th",
                                  "compute_dtype", "elementwise_dtype",
                                  "approximate_gelu", "out_dtype",
                                  "force_hidden_blocking"))

    # 1) Performance path: fused kernel (weights resident, Buffered(1)), bf16 MXU
    #    inputs with f32 accumulation, tanh GELU.
    out = fn(x, w1, b1, w2, b2, chunks=CHUNKS, bucket_size=BUCKET_SIZE)
    out = jax.block_until_ready(out)
    assert out.shape == (B, N, D)
    assert float(jnp.max(jnp.abs(out - ref))) < 5e-2, "bf16 kernel mismatch vs reference"

    # 2) Strict-parity path: same fused kernel, pure f32 compute, exact-erf GELU.
    out32 = fn(x, w1, b1, w2, b2, chunks=CHUNKS, bucket_size=BUCKET_SIZE,
               compute_dtype=jnp.float32, approximate_gelu=False)
    out32 = jax.block_until_ready(out32)
    assert jnp.allclose(out32, ref, atol=1e-3, rtol=1e-3), "f32 fused kernel mismatch"

    # 3) Blocked fallback path (forced): exercises the H-sliced accumulator kernel.
    outb = fn(x, w1, b1, w2, b2, chunks=CHUNKS, bucket_size=BUCKET_SIZE,
              compute_dtype=jnp.float32, approximate_gelu=False,
              th=128, force_hidden_blocking=True)
    outb = jax.block_until_ready(outb)
    assert jnp.allclose(outb, ref, atol=1e-3, rtol=1e-3), "f32 blocked kernel mismatch"

    print("KERNEL_OK")
</pallas_src>

<mosaic_0001>
module attributes {stable_mosaic.version = 11 : i64} {
  func.func @_ff_fused_kernel(%arg0: i32, %arg1: memref<64x128xf32, #tpu.memory_space<vmem>>, %arg2: memref<128x256xbf16, #tpu.memory_space<vmem>>, %arg3: memref<1x256xf32, #tpu.memory_space<vmem>>, %arg4: memref<256x128xbf16, #tpu.memory_space<vmem>>, %arg5: memref<1x128xf32, #tpu.memory_space<vmem>>, %arg6: memref<64x128xf32, #tpu.memory_space<vmem>>) attributes {dimension_semantics = [#tpu.dimension_semantics<parallel>], iteration_bounds = array<i64: 2>, scalar_prefetch = 0 : i64, scratch_operands = 0 : i64, tpu.core_type = #tpu.core_type<tc>, window_params = [{transform_indices = @transform_0, window_bounds = array<i64: 64, 128>}, {pipeline_mode = #tpu.pipeline_mode<synchronous>, transform_indices = @transform_1, window_bounds = array<i64: 128, 256>}, {pipeline_mode = #tpu.pipeline_mode<synchronous>, transform_indices = @transform_2, window_bounds = array<i64: 1, 256>}, {pipeline_mode = #tpu.pipeline_mode<synchronous>, transform_indices = @transform_3, window_bounds = array<i64: 256, 128>}, {pipeline_mode = #tpu.pipeline_mode<synchronous>, transform_indices = @transform_4, window_bounds = array<i64: 1, 128>}, {transform_indices = @transform_5, window_bounds = array<i64: 64, 128>}]} {
    %c0 = arith.constant 0 : index
    %c0_0 = arith.constant 0 : index
    %0 = vector.load %arg1[%c0, %c0_0] : memref<64x128xf32, #tpu.memory_space<vmem>>, vector<64x128xf32>
    %1 = arith.truncf %0 : vector<64x128xf32> to vector<64x128xbf16>
    %c0_1 = arith.constant 0 : index
    %c0_2 = arith.constant 0 : index
    %2 = vector.load %arg2[%c0_1, %c0_2] : memref<128x256xbf16, #tpu.memory_space<vmem>>, vector<128x256xbf16>
    %cst = arith.constant dense<0.000000e+00> : vector<64x256xf32>
    %3 = tpu.matmul %1, %2, %cst {dimension_numbers = #tpu.dot_dimension_numbers<[1], [0], [0], [1], [0, 0, 1, 1], [], []>} : vector<64x128xbf16>, vector<128x256xbf16>, vector<64x256xf32> -> vector<64x256xf32>
    %c0_3 = arith.constant 0 : index
    %c0_4 = arith.constant 0 : index
    %4 = vector.load %arg3[%c0_3, %c0_4] : memref<1x256xf32, #tpu.memory_space<vmem>>, vector<1x256xf32>
    %5 = vector.broadcast %4 : vector<1x256xf32> to vector<64x256xf32>
    %6 = arith.addf %3, %5 : vector<64x256xf32>
    %7 = arith.mulf %6, %6 : vector<64x256xf32>
    %8 = arith.mulf %6, %7 : vector<64x256xf32>
    %cst_5 = arith.constant 4.471500e-02 : f32
    %9 = vector.broadcast %cst_5 : f32 to vector<64x256xf32>
    %10 = arith.mulf %9, %8 : vector<64x256xf32>
    %11 = arith.addf %6, %10 : vector<64x256xf32>
    %cst_6 = arith.constant 0.797884583 : f32
    %12 = vector.broadcast %cst_6 : f32 to vector<64x256xf32>
    %13 = arith.mulf %12, %11 : vector<64x256xf32>
    %14 = math.tanh %13 : vector<64x256xf32>
    %cst_7 = arith.constant 1.000000e+00 : f32
    %15 = vector.broadcast %cst_7 : f32 to vector<64x256xf32>
    %16 = arith.addf %15, %14 : vector<64x256xf32>
    %cst_8 = arith.constant 5.000000e-01 : f32
    %17 = vector.broadcast %cst_8 : f32 to vector<64x256xf32>
    %18 = arith.mulf %17, %16 : vector<64x256xf32>
    %19 = arith.mulf %6, %18 : vector<64x256xf32>
    %20 = arith.truncf %19 : vector<64x256xf32> to vector<64x256xbf16>
    %c0_9 = arith.constant 0 : index
    %c0_10 = arith.constant 0 : index
    %21 = vector.load %arg4[%c0_9, %c0_10] : memref<256x128xbf16, #tpu.memory_space<vmem>>, vector<256x128xbf16>
    %cst_11 = arith.constant dense<0.000000e+00> : vector<64x128xf32>
    %22 = tpu.matmul %20, %21, %cst_11 {dimension_numbers = #tpu.dot_dimension_numbers<[1], [0], [0], [1], [0, 0, 1, 1], [], []>} : vector<64x256xbf16>, vector<256x128xbf16>, vector<64x128xf32> -> vector<64x128xf32>
    %c0_12 = arith.constant 0 : index
    %c0_13 = arith.constant 0 : index
    %23 = vector.load %arg5[%c0_12, %c0_13] : memref<1x128xf32, #tpu.memory_space<vmem>>, vector<1x128xf32>
    %24 = vector.broadcast %23 : vector<1x128xf32> to vector<64x128xf32>
    %25 = arith.addf %22, %24 : vector<64x128xf32>
    %c0_14 = arith.constant 0 : index
    %c0_15 = arith.constant 0 : index
    %26 = vector.load %arg6[%c0_14, %c0_15] : memref<64x128xf32, #tpu.memory_space<vmem>>, vector<64x128xf32>
    tpu.vector_store %arg6[%c0_14, %c0_15], %25 {strides = array<i32>} : memref<64x128xf32, #tpu.memory_space<vmem>>, vector<64x128xf32>,
    return
  }
  func.func @transform_0(%arg0: i32) -> (i32, i32) {
    %c0_i32 = arith.constant 0 : i32
    %c0_i32_0 = arith.constant 0 : i32
    return %arg0, %c0_i32 : i32, i32
  }
  func.func @transform_1(%arg0: i32) -> (i32, i32) {
    %c0_i32 = arith.constant 0 : i32
    %c0_i32_0 = arith.constant 0 : i32
    %c0_i32_1 = arith.constant 0 : i32
    return %c0_i32, %c0_i32_0 : i32, i32
  }
  func.func @transform_2(%arg0: i32) -> (i32, i32) {
    %c0_i32 = arith.constant 0 : i32
    %c0_i32_0 = arith.constant 0 : i32
    %c0_i32_1 = arith.constant 0 : i32
    return %c0_i32, %c0_i32_0 : i32, i32
  }
  func.func @transform_3(%arg0: i32) -> (i32, i32) {
    %c0_i32 = arith.constant 0 : i32
    %c0_i32_0 = arith.constant 0 : i32
    %c0_i32_1 = arith.constant 0 : i32
    return %c0_i32, %c0_i32_0 : i32, i32
  }
  func.func @transform_4(%arg0: i32) -> (i32, i32) {
    %c0_i32 = arith.constant 0 : i32
    %c0_i32_0 = arith.constant 0 : i32
    %c0_i32_1 = arith.constant 0 : i32
    return %c0_i32, %c0_i32_0 : i32, i32
  }
  func.func @transform_5(%arg0: i32) -> (i32, i32) {
    %c0_i32 = arith.constant 0 : i32
    %c0_i32_0 = arith.constant 0 : i32
    return %arg0, %c0_i32 : i32, i32
  }
}

</mosaic_0001>

<llo_original>
// kernel: chunk_feedforward.1
$region0: #{chunk_feedforward.1}
  #allocation0 [shape = 'u32[]', space=smem, size = 0x4, offset = 0x4, fixed_abs, tag = 'smem constant byte address 0x4 - core index']
  #allocation1 [shape = 'u32[144,128]{1,0:T(1,128)}', space=vmem, size = 0x12000, scoped, tag = 'internal scratch']
  %s0 = inlined_call_operand.vmem [shape: f32[128,128], index: 0, kind: input, shape index: {}]
  %s1 = inlined_call_operand.vmem [shape: bf16[128,256], index: 1, kind: input, shape index: {}]
  %s2 = inlined_call_operand.vmem [shape: f32[1,256], index: 2, kind: input, shape index: {}]
  %s3 = inlined_call_operand.vmem [shape: bf16[256,128], index: 3, kind: input, shape index: {}]
  %s4 = inlined_call_operand.vmem [shape: f32[1,128], index: 4, kind: input, shape index: {}]
  %s5 = inlined_call_operand.hbm [shape: f32[128,128], index: 5, kind: output, shape index: {}]
  %s6 = sld [smem:[#allocation0]]
  $region53: #{chunk_feedforward.1} parent=0
    _
  %s8 = ssub.s32 1, %s6
  %s9 = scalar_select 0, %s8, %s6
  $region1: #{chunk_feedforward.1} parent=0
    #allocation2 [shape = 'u8[65536]{0}', space=vmem, size = 0x10000, scoped, tag = 'output window, operand 0']
    #allocation3 [shape = 's32[2]{0}', space=sflag, size = 0x8, scoped, tag = 'scoped memory for chunk_feedforward.1']
    %10 = vsyncpa [#allocation3], 0
    %s11 = scalar_lea.sflag [#allocation3], 1
    %12 = vsyncpa %s11, 0
    loop: start=0, step=1, limit=4
    $region2: #{chunk_feedforward.1} parent=1 // loop_pre_header
      _
    $region3: #{chunk_feedforward.1} parent=1 // loop_header
      %s14 = sphi 0, %s18
      %p15 = scmp.ge.s32.totalorder %s14, 4
      %s24 = sphi 0, %s26
      %s27 = sphi 0, %s24
      %s28 = sphi 0, %s27
      %s44 = sphi 0, %s28
      %s48 = sphi 0, %s48
      %s50 = sphi 0, %s48
      %s51 = sphi 0, %s50
      %s65 = sphi 0, %s51
      %s69 = sphi 0, %s69
      %s71 = sphi 0, %s69
      %s72 = sphi 0, %s71
      %s86 = sphi 0, %s72
      %s90 = sphi 0, %s90
      %s92 = sphi 0, %s90
      %s93 = sphi 0, %s92
      %s107 = sphi 0, %s93
      %s111 = sphi 0, %s111
      %s113 = sphi 0, %s111
      %s114 = sphi 0, %s113
      %s128 = sphi 0, %s114
      %s134 = sphi 0, %s136
      %s137 = sphi 0, %s134
      %s138 = sphi 0, %s137
      %s154 = sphi 0, %s138
    $region4: #{chunk_feedforward.1} parent=1 // loop_header_branch
      %17 = sbr.rel (%p15) target = $region8
    $region5: #{chunk_feedforward.1} parent=1 // loop_body
      %s19 = ssub.s32 %s14, 1
      %s20 = ssub.s32 %s14, 2
      %s21 = sadd.s32 %s14, 1
      %s22 = ssub.s32 %s14, %s21
      %p23 = scmp.eq.s32.totalorder %s22, 0
      %s25 = sadd.s32 %s24, 1
      %s26 = scalar_select %p23, %s24, %s25
      %p29 = pneg %p23
      %p30 = scmp.eq.s32.totalorder %s14, 1
      %p31 = por %p29, %p30
      %p32 = scmp.ne.s32.totalorder %s24, %s27
      %p33 = scmp.eq.s32.totalorder %s14, 0
      %p34 = por %p32, %p33
      %p35 = scmp.ne.s32.totalorder %s24, %s27
      %p36 = scmp.eq.s32.totalorder %s19, 1
      %p37 = por %p35, %p36
      %p38 = scmp.ne.s32.totalorder %s27, %s28
      %p39 = scmp.eq.s32.totalorder %s19, 0
      %p40 = por %p38, %p39
      %p41 = scmp.ne.s32.totalorder %s27, %s28
      %p42 = scmp.eq.s32.totalorder %s20, 1
      %p43 = por %p41, %p42
      %p45 = scmp.ne.s32.totalorder %s28, %s44
      %p46 = scmp.eq.s32.totalorder %s20, 0
      %p47 = por %p45, %p46
      %s49 = sadd.s32 %s48, 1
      %p52 = scmp.eq.s32.totalorder %s14, 1
      %p53 = scmp.ne.s32.totalorder %s48, %s50
      %p54 = scmp.eq.s32.totalorder %s14, 0
      %p55 = por %p53, %p54
      %p56 = scmp.ne.s32.totalorder %s48, %s50
      %p57 = scmp.eq.s32.totalorder %s19, 1
      %p58 = por %p56, %p57
      %p59 = scmp.ne.s32.totalorder %s50, %s51
      %p60 = scmp.eq.s32.totalorder %s19, 0
      %p61 = por %p59, %p60
      %p62 = scmp.ne.s32.totalorder %s50, %s51
      %p63 = scmp.eq.s32.totalorder %s20, 1
      %p64 = por %p62, %p63
      %p66 = scmp.ne.s32.totalorder %s51, %s65
      %p67 = scmp.eq.s32.totalorder %s20, 0
      %p68 = por %p66, %p67
      %s70 = sadd.s32 %s69, 1
      %p73 = scmp.eq.s32.totalorder %s14, 1
      %p74 = scmp.ne.s32.totalorder %s69, %s71
      %p75 = scmp.eq.s32.totalorder %s14, 0
      %p76 = por %p74, %p75
      %p77 = scmp.ne.s32.totalorder %s69, %s71
      %p78 = scmp.eq.s32.totalorder %s19, 1
      %p79 = por %p77, %p78
      %p80 = scmp.ne.s32.totalorder %s71, %s72
      %p81 = scmp.eq.s32.totalorder %s19, 0
      %p82 = por %p80, %p81
      %p83 = scmp.ne.s32.totalorder %s71, %s72
      %p84 = scmp.eq.s32.totalorder %s20, 1
      %p85 = por %p83, %p84
      %p87 = scmp.ne.s32.totalorder %s72, %s86
      %p88 = scmp.eq.s32.totalorder %s20, 0
      %p89 = por %p87, %p88
      %s91 = sadd.s32 %s90, 1
      %p94 = scmp.eq.s32.totalorder %s14, 1
      %p95 = scmp.ne.s32.totalorder %s90, %s92
      %p96 = scmp.eq.s32.totalorder %s14, 0
      %p97 = por %p95, %p96
      %p98 = scmp.ne.s32.totalorder %s90, %s92
      %p99 = scmp.eq.s32.totalorder %s19, 1
      %p100 = por %p98, %p99
      %p101 = scmp.ne.s32.totalorder %s92, %s93
      %p102 = scmp.eq.s32.totalorder %s19, 0
      %p103 = por %p101, %p102
      %p104 = scmp.ne.s32.totalorder %s92, %s93
      %p105 = scmp.eq.s32.totalorder %s20, 1
      %p106 = por %p104, %p105
      %p108 = scmp.ne.s32.totalorder %s93, %s107
      %p109 = scmp.eq.s32.totalorder %s20, 0
      %p110 = por %p108, %p109
      %s112 = sadd.s32 %s111, 1
      %p115 = scmp.eq.s32.totalorder %s14, 1
      %p116 = scmp.ne.s32.totalorder %s111, %s113
      %p117 = scmp.eq.s32.totalorder %s14, 0
      %p118 = por %p116, %p117
      %p119 = scmp.ne.s32.totalorder %s111, %s113
      %p120 = scmp.eq.s32.totalorder %s19, 1
      %p121 = por %p119, %p120
      %p122 = scmp.ne.s32.totalorder %s113, %s114
      %p123 = scmp.eq.s32.totalorder %s19, 0
      %p124 = por %p122, %p123
      %p125 = scmp.ne.s32.totalorder %s113, %s114
      %p126 = scmp.eq.s32.totalorder %s20, 1
      %p127 = por %p125, %p126
      %p129 = scmp.ne.s32.totalorder %s114, %s128
      %p130 = scmp.eq.s32.totalorder %s20, 0
      %p131 = por %p129, %p130
      %s132 = ssub.s32 %s14, %s21
      %p133 = scmp.eq.s32.totalorder %s132, 0
      %s135 = sadd.s32 %s134, 1
      %s136 = scalar_select %p133, %s134, %s135
      %p139 = pneg %p133
      %p140 = scmp.eq.s32.totalorder %s14, 1
      %p141 = por %p139, %p140
      %p142 = scmp.ne.s32.totalorder %s134, %s137
      %p143 = scmp.eq.s32.totalorder %s14, 0
      %p144 = por %p142, %p143
      %p145 = scmp.ne.s32.totalorder %s134, %s137
      %p146 = scmp.eq.s32.totalorder %s19, 1
      %p147 = por %p145, %p146
      %p148 = scmp.ne.s32.totalorder %s137, %s138
      %p149 = scmp.eq.s32.totalorder %s19, 0
      %p150 = por %p148, %p149
      %p151 = scmp.ne.s32.totalorder %s137, %s138
      %p152 = scmp.eq.s32.totalorder %s20, 1
      %p153 = por %p151, %p152
      %p155 = scmp.ne.s32.totalorder %s138, %s154
      %p156 = scmp.eq.s32.totalorder %s20, 0
      %p157 = por %p155, %p156
      %p158 = scmp.le.s32.totalorder 1, %s14
      %p159 = scmp.lt.s32.totalorder %s14, 3
      %p160 = pnand %p158, %p159
      %p161 = pneg %p160
      // Predicated region
      $region9: #{chunk_feedforward.1} parent=5 // pred_check
        _
      $region10: #{chunk_feedforward.1} parent=5 // pred_check_branch
        %163 = sbr.rel (%p160) target = $region12
      $region11: #{chunk_feedforward.1} parent=5 // pred_region
        %s164 = ssub.s32 %s14, 1
        // Predicated region
        $region13: #{chunk_feedforward.1} parent=11 // pred_check
          %p165 = pneg %p61
        $region14: #{chunk_feedforward.1} parent=11 // pred_check_branch
          %167 = sbr.rel (%p165) target = $region16
        $region15: #{chunk_feedforward.1} parent=11 // pred_region
          _
        $region16: #{chunk_feedforward.1} parent=11 // pred_fallthru
          _
        // Predicated region
        $region17: #{chunk_feedforward.1} parent=11 // pred_check
          %p168 = pneg %p82
        $region18: #{chunk_feedforward.1} parent=11 // pred_check_branch
          %170 = sbr.rel (%p168) target = $region20
        $region19: #{chunk_feedforward.1} parent=11 // pred_region
          _
        $region20: #{chunk_feedforward.1} parent=11 // pred_fallthru
          _
        // Predicated region
        $region21: #{chunk_feedforward.1} parent=11 // pred_check
          %p171 = pneg %p103
        $region22: #{chunk_feedforward.1} parent=11 // pred_check_branch
          %173 = sbr.rel (%p171) target = $region24
        $region23: #{chunk_feedforward.1} parent=11 // pred_region
          _
        $region24: #{chunk_feedforward.1} parent=11 // pred_fallthru
          _
        // Predicated region
        $region25: #{chunk_feedforward.1} parent=11 // pred_check
          %p174 = pneg %p124
        $region26: #{chunk_feedforward.1} parent=11 // pred_check_branch
          %176 = sbr.rel (%p174) target = $region28
        $region27: #{chunk_feedforward.1} parent=11 // pred_region
          _
        $region28: #{chunk_feedforward.1} parent=11 // pred_fallthru
          _
      $region12: #{chunk_feedforward.1} parent=5 // pred_fallthru
        _
      %p177 = scmp.lt.s32.totalorder %s14, 2
      // Predicated region
      $region29: #{chunk_feedforward.1} parent=5 // pred_check
        %p178 = pneg %p177
      $region30: #{chunk_feedforward.1} parent=5 // pred_check_branch
        %180 = sbr.rel (%p178) target = $region32
      $region31: #{chunk_feedforward.1} parent=5 // pred_region
        // Predicated region
        $region33: #{chunk_feedforward.1} parent=31 // pred_check
          %p181 = pneg %p34
        $region34: #{chunk_feedforward.1} parent=31 // pred_check_branch
          %183 = sbr.rel (%p181) target = $region36
        $region35: #{chunk_feedforward.1} parent=31 // pred_region
          %s184 = smul.u32 8, %s14
          %p185 = scmp.lt.s32.totalorder %s184, 15
          %s186 = scalar_select %p185, %s184, 15
          %s187 = smul.addr %s186, 8
          %s188 = scalar_lea.vmem %s0, %s187
          %s189 = smul.u32 8, %s14
        $region36: #{chunk_feedforward.1} parent=31 // pred_fallthru
          _
      $region32: #{chunk_feedforward.1} parent=5 // pred_fallthru
        _
      %p190 = scmp.le.s32.totalorder 1, %s14
      %p191 = scmp.lt.s32.totalorder %s14, 3
      %p192 = pnand %p190, %p191
      %p193 = pneg %p192
      // Predicated region
      $region37: #{chunk_feedforward.1} parent=5 // pred_check
        _
      $region38: #{chunk_feedforward.1} parent=5 // pred_check_branch
        %195 = sbr.rel (%p192) target = $region40
      $region39: #{chunk_feedforward.1} parent=5 // pred_region
        %s196 = ssub.s32 %s14, 1
        %s197 = smul.u32 8, %s19
        %p198 = scmp.lt.s32.totalorder %s197, 15
        %s199 = scalar_select %p198, %s197, 15
        %s200 = smul.addr %s199, 8
        %s201 = scalar_lea.vmem %s0, %s200
        %p202 = pneg %p40
        %p203 = pneg %p37
        %p204 = pneg %p61
        %p205 = pneg %p58
        %p206 = pneg %p82
        %p207 = pneg %p79
        %p208 = pneg %p103
        %p209 = pneg %p100
        %p210 = pneg %p124
        %p211 = pneg %p121
        %p212 = pneg %p150
        %p213 = pneg %p147
        %s214 = sand.u32 %s137, 1
        %s215 = scalar_lea.sflag [#allocation3], %s214
        %s216 = sand.u32 %s137, 1
        %s217 = smul.addr %s216, 64
        %s218 = scalar_lea.vmem [#allocation2], %s217
        %s219 = smul.u32 8, %s19
        %p220 = scmp.lt.s32.totalorder %s219, 15
        %s221 = scalar_select %p220, %s219, 15
        %s222 = smul.addr %s221, 8
        %s223 = scalar_lea.vmem %s0, %s222
        %s224 = smul.u32 8, %s19
        %s225 = smul.u32 8, %s19
        %v227 = vld [vmem:[%s223] sm:$0xff]
        %v228 = vld [vmem:[%s223 + $0x8] sm:$0xff]
        %v229 = vld [vmem:[%s223 + $0x10] sm:$0xff]
        %v230 = vld [vmem:[%s223 + $0x18] sm:$0xff]
        %v231 = vld [vmem:[%s223 + $0x20] sm:$0xff]
        %v232 = vld [vmem:[%s223 + $0x28] sm:$0xff]
        %v233 = vld [vmem:[%s223 + $0x30] sm:$0xff]
        %v234 = vld [vmem:[%s223 + $0x38] sm:$0xff]
        %v235 = vpack.c.bf16 %v228, %v227
        %v236 = vpack.c.bf16 %v230, %v229
        %v237 = vpack.c.bf16 %v232, %v231
        %v238 = vpack.c.bf16 %v234, %v233
        %v239 = vld [vmem:[%s1] sm:$0xff]
        %v240 = vld [vmem:[%s1 + $0x8] sm:$0xff]
        %v241 = vld [vmem:[%s1 + $0x10] sm:$0xff]
        %v242 = vld [vmem:[%s1 + $0x18] sm:$0xff]
        %v243 = vld [vmem:[%s1 + $0x20] sm:$0xff]
        %v244 = vld [vmem:[%s1 + $0x28] sm:$0xff]
        %v245 = vld [vmem:[%s1 + $0x30] sm:$0xff]
        %v246 = vld [vmem:[%s1 + $0x38] sm:$0xff]
        %v247 = vld [vmem:[%s1 + $0x40] sm:$0xff]
        %v248 = vld [vmem:[%s1 + $0x48] sm:$0xff]
        %v249 = vld [vmem:[%s1 + $0x50] sm:$0xff]
        %v250 = vld [vmem:[%s1 + $0x58] sm:$0xff]
        %v251 = vld [vmem:[%s1 + $0x60] sm:$0xff]
        %v252 = vld [vmem:[%s1 + $0x68] sm:$0xff]
        %v253 = vld [vmem:[%s1 + $0x70] sm:$0xff]
        %v254 = vld [vmem:[%s1 + $0x78] sm:$0xff]
        %v255 = vld [vmem:[%s2] sm:$0x3]
        %v257 = vlaneseq
        %v258 = vshrl.u32 %v257, 7
        %v259 = vsub.s32 0, %v258
        %v260 = vrot.slane %v255, %v259
        %v261 = vlaneseq
        %v262 = vshrl.u32 %v261, 7
        %v263 = vsub.s32 1, %v262
        %v264 = vrot.slane %v255, %v263
        %v283 = vunpack.c.l.b16 %v239
        %v284 = vunpack.c.h.b16 %v239
        %v285 = vunpack.c.l.b16 %v240
        %v286 = vunpack.c.h.b16 %v240
        %v287 = vunpack.c.l.b16 %v241
        %v288 = vunpack.c.h.b16 %v241
        %v289 = vunpack.c.l.b16 %v242
        %v290 = vunpack.c.h.b16 %v242
        %v291 = vunpack.c.l.b16 %v243
        %v292 = vunpack.c.h.b16 %v243
        %v293 = vunpack.c.l.b16 %v244
        %v294 = vunpack.c.h.b16 %v244
        %v295 = vunpack.c.l.b16 %v245
        %v296 = vunpack.c.h.b16 %v245
        %v297 = vunpack.c.l.b16 %v246
        %v298 = vunpack.c.h.b16 %v246
        %v299 = vunpack.c.l.b16 %v247
        %v300 = vunpack.c.h.b16 %v247
        %v301 = vunpack.c.l.b16 %v248
        %v302 = vunpack.c.h.b16 %v248
        %v303 = vunpack.c.l.b16 %v249
        %v304 = vunpack.c.h.b16 %v249
        %v305 = vunpack.c.l.b16 %v250
        %v306 = vunpack.c.h.b16 %v250
        %v307 = vunpack.c.l.b16 %v251
        %v308 = vunpack.c.h.b16 %v251
        %v309 = vunpack.c.l.b16 %v252
        %v310 = vunpack.c.h.b16 %v252
        %v311 = vunpack.c.l.b16 %v253
        %v312 = vunpack.c.h.b16 %v253
        %v313 = vunpack.c.l.b16 %v254
        %v314 = vunpack.c.h.b16 %v254
        %v315 = vpack.c.b16 %v285, %v283
        %v316 = vpack.c.b16 %v286, %v284
        %v317 = vpack.c.b16 %v289, %v287
        %v318 = vpack.c.b16 %v290, %v288
        %v319 = vpack.c.b16 %v293, %v291
        %v320 = vpack.c.b16 %v294, %v292
        %v321 = vpack.c.b16 %v297, %v295
        %v322 = vpack.c.b16 %v298, %v296
        %v323 = vpack.c.b16 %v301, %v299
        %v324 = vpack.c.b16 %v302, %v300
        %v325 = vpack.c.b16 %v305, %v303
        %v326 = vpack.c.b16 %v306, %v304
        %v327 = vpack.c.b16 %v309, %v307
        %v328 = vpack.c.b16 %v310, %v308
        %v329 = vpack.c.b16 %v313, %v311
        %v330 = vpack.c.b16 %v314, %v312
        %347 = vmatprep.subr.bf16.mxu0 %v316
        %348 = vmatpush1.bf16.msra.mxu0 %v315
        %349 = vmatprep.subr.bf16.mxu0 %v318
        %350 = vmatpush1.bf16.msra.mxu0 %v317
        %351 = vmatprep.subr.bf16.mxu0 %v320
        %352 = vmatpush1.bf16.msra.mxu0 %v319
        %353 = vmatprep.subr.bf16.mxu0 %v322
        %354 = vmatpush1.bf16.msra.mxu0 %v321
        %355 = vmatprep.subr.bf16.mxu0 %v324
        %356 = vmatpush1.bf16.msra.mxu0 %v323
        %357 = vmatprep.subr.bf16.mxu0 %v326
        %358 = vmatpush1.bf16.msra.mxu0 %v325
        %359 = vmatprep.subr.bf16.mxu0 %v328
        %360 = vmatpush1.bf16.msra.mxu0 %v327
        %361 = vmatprep.subr.bf16.mxu0 %v330
        %362 = vmatpush1.bf16.msra.mxu0 %v329
        %363 = vmatprep.subr.bf16.mxu0 0
        %364 = vmatpush1.bf16.msra.mxu0 0
        %365 = vmatprep.subr.bf16.mxu0 0
        %366 = vmatpush1.bf16.msra.mxu0 0
        %367 = vmatprep.subr.bf16.mxu0 0
        %368 = vmatpush1.bf16.msra.mxu0 0
        %369 = vmatprep.subr.bf16.mxu0 0
        %370 = vmatpush1.bf16.msra.mxu0 0
        %371 = vmatprep.subr.bf16.mxu0 0
        %372 = vmatpush1.bf16.msra.mxu0 0
        %373 = vmatprep.subr.bf16.mxu0 0
        %374 = vmatpush1.bf16.msra.mxu0 0
        %375 = vmatprep.subr.bf16.mxu0 0
        %376 = vmatpush1.bf16.msra.mxu0 0
        %377 = vmatprep.subr.bf16.mxu0 0
        %378 = vmatpush1.bf16.msra.mxu0 0
        %379 = vmatprep.mubr.bf16.mxu0 0
        %380 = vmatmul.mubr.bf16.gmra.mrb[0].mxu0 %v235
        %v381 = vpop.f32.mrb[0].mxu0
        %v382 = vadd.f32 %v260, %v381
        %v383 = vpop.f32.mrb[0].mxu0
        %v384 = vadd.f32 %v264, %v383
        %v385 = vpop.f32.mrb[0].mxu0
        %v386 = vadd.f32 %v260, %v385
        %v387 = vpop.f32.mrb[0].mxu0
        %v388 = vadd.f32 %v264, %v387
        %389 = vmatprep.mubr.bf16.mxu0 0
        %390 = vmatmul.mubr.bf16.gmra.mrb[0].mxu0 %v236
        %v391 = vpop.f32.mrb[0].mxu0
        %v392 = vadd.f32 %v260, %v391
        %v393 = vpop.f32.mrb[0].mxu0
        %v394 = vadd.f32 %v264, %v393
        %v395 = vpop.f32.mrb[0].mxu0
        %v396 = vadd.f32 %v260, %v395
        %v397 = vpop.f32.mrb[0].mxu0
        %v398 = vadd.f32 %v264, %v397
        %399 = vmatprep.mubr.bf16.mxu0 0
        %400 = vmatmul.mubr.bf16.gmra.mrb[0].mxu0 %v237
        %v401 = vpop.f32.mrb[0].mxu0
        %v402 = vadd.f32 %v260, %v401
        %v403 = vpop.f32.mrb[0].mxu0
        %v404 = vadd.f32 %v264, %v403
        %v405 = vpop.f32.mrb[0].mxu0
        %v406 = vadd.f32 %v260, %v405
        %v407 = vpop.f32.mrb[0].mxu0
        %v408 = vadd.f32 %v264, %v407
        %409 = vmatprep.mubr.bf16.mxu0 0
        %410 = vmatmul.mubr.bf16.gmra.mrb[0].mxu0 %v238
        %v411 = vpop.f32.mrb[0].mxu0
        %v412 = vadd.f32 %v260, %v411
        %v413 = vpop.f32.mrb[0].mxu0
        %v414 = vadd.f32 %v264, %v413
        %v415 = vpop.f32.mrb[0].mxu0
        %v416 = vadd.f32 %v260, %v415
        %v417 = vpop.f32.mrb[0].mxu0
        %v418 = vadd.f32 %v264, %v417
        %419 = vdwg.mxu0
        %v420 = vmul.f32 %v382, %v382
        %v421 = vmul.f32 %v384, %v384
        %v422 = vmul.f32 %v386, %v386
        %v423 = vmul.f32 %v388, %v388
        %v424 = vmul.f32 %v392, %v392
        %v425 = vmul.f32 %v394, %v394
        %v426 = vmul.f32 %v396, %v396
        %v427 = vmul.f32 %v398, %v398
        %v428 = vmul.f32 %v402, %v402
        %v429 = vmul.f32 %v404, %v404
        %v430 = vmul.f32 %v406, %v406
        %v431 = vmul.f32 %v408, %v408
        %v432 = vmul.f32 %v412, %v412
        %v433 = vmul.f32 %v414, %v414
        %v434 = vmul.f32 %v416, %v416
        %v435 = vmul.f32 %v418, %v418
        %v436 = vmul.f32 %v382, %v420
        %v437 = vmul.f32 %v384, %v421
        %v438 = vmul.f32 %v386, %v422
        %v439 = vmul.f32 %v388, %v423
        %v440 = vmul.f32 %v392, %v424
        %v441 = vmul.f32 %v394, %v425
        %v442 = vmul.f32 %v396, %v426
        %v443 = vmul.f32 %v398, %v427
        %v444 = vmul.f32 %v402, %v428
        %v445 = vmul.f32 %v404, %v429
        %v446 = vmul.f32 %v406, %v430
        %v447 = vmul.f32 %v408, %v431
        %v448 = vmul.f32 %v412, %v432
        %v449 = vmul.f32 %v414, %v433
        %v450 = vmul.f32 %v416, %v434
        %v451 = vmul.f32 %v418, %v435
        %v452 = vmul.f32 %v436, 0.044715
        %v453 = vmul.f32 %v437, 0.044715
        %v454 = vmul.f32 %v438, 0.044715
        %v455 = vmul.f32 %v439, 0.044715
        %v456 = vmul.f32 %v440, 0.044715
        %v457 = vmul.f32 %v441, 0.044715
        %v458 = vmul.f32 %v442, 0.044715
        %v459 = vmul.f32 %v443, 0.044715
        %v460 = vmul.f32 %v444, 0.044715
        %v461 = vmul.f32 %v445, 0.044715
        %v462 = vmul.f32 %v446, 0.044715
        %v463 = vmul.f32 %v447, 0.044715
        %v464 = vmul.f32 %v448, 0.044715
        %v465 = vmul.f32 %v449, 0.044715
        %v466 = vmul.f32 %v450, 0.044715
        %v467 = vmul.f32 %v451, 0.044715
        %v468 = vadd.f32 %v382, %v452
        %v469 = vadd.f32 %v384, %v453
        %v470 = vadd.f32 %v386, %v454
        %v471 = vadd.f32 %v388, %v455
        %v472 = vadd.f32 %v392, %v456
        %v473 = vadd.f32 %v394, %v457
        %v474 = vadd.f32 %v396, %v458
        %v475 = vadd.f32 %v398, %v459
        %v476 = vadd.f32 %v402, %v460
        %v477 = vadd.f32 %v404, %v461
        %v478 = vadd.f32 %v406, %v462
        %v479 = vadd.f32 %v408, %v463
        %v480 = vadd.f32 %v412, %v464
        %v481 = vadd.f32 %v414, %v465
        %v482 = vadd.f32 %v416, %v466
        %v483 = vadd.f32 %v418, %v467
        %v484 = vmul.f32 %v468, 0.7978846
        %v485 = vmul.f32 %v469, 0.7978846
        %v486 = vmul.f32 %v470, 0.7978846
        %v487 = vmul.f32 %v471, 0.7978846
        %v488 = vmul.f32 %v472, 0.7978846
        %v489 = vmul.f32 %v473, 0.7978846
        %v490 = vmul.f32 %v474, 0.7978846
        %v491 = vmul.f32 %v475, 0.7978846
        %v492 = vmul.f32 %v476, 0.7978846
        %v493 = vmul.f32 %v477, 0.7978846
        %v494 = vmul.f32 %v478, 0.7978846
        %v495 = vmul.f32 %v479, 0.7978846
        %v496 = vmul.f32 %v480, 0.7978846
        %v497 = vmul.f32 %v481, 0.7978846
        %v498 = vmul.f32 %v482, 0.7978846
        %v499 = vmul.f32 %v483, 0.7978846
        %v500 = vtanh.pop %v484
        %v501 = vtanh.pop %v485
        %v502 = vtanh.pop %v486
        %v503 = vtanh.pop %v487
        %v504 = vtanh.pop %v488
        %v505 = vtanh.pop %v489
        %v506 = vtanh.pop %v490
        %v507 = vtanh.pop %v491
        %v508 = vtanh.pop %v492
        %v509 = vtanh.pop %v493
        %v510 = vtanh.pop %v494
        %v511 = vtanh.pop %v495
        %v512 = vtanh.pop %v496
        %v513 = vtanh.pop %v497
        %v514 = vtanh.pop %v498
        %v515 = vtanh.pop %v499
        %v516 = vadd.f32 %v500, 1.0
        %v517 = vadd.f32 %v501, 1.0
        %v518 = vadd.f32 %v502, 1.0
        %v519 = vadd.f32 %v503, 1.0
        %v520 = vadd.f32 %v504, 1.0
        %v521 = vadd.f32 %v505, 1.0
        %v522 = vadd.f32 %v506, 1.0
        %v523 = vadd.f32 %v507, 1.0
        %v524 = vadd.f32 %v508, 1.0
        %v525 = vadd.f32 %v509, 1.0
        %v526 = vadd.f32 %v510, 1.0
        %v527 = vadd.f32 %v511, 1.0
        %v528 = vadd.f32 %v512, 1.0
        %v529 = vadd.f32 %v513, 1.0
        %v530 = vadd.f32 %v514, 1.0
        %v531 = vadd.f32 %v515, 1.0
        %v532 = vmul.f32 %v516, 0.5
        %v533 = vmul.f32 %v517, 0.5
        %v534 = vmul.f32 %v518, 0.5
        %v535 = vmul.f32 %v519, 0.5
        %v536 = vmul.f32 %v520, 0.5
        %v537 = vmul.f32 %v521, 0.5
        %v538 = vmul.f32 %v522, 0.5
        %v539 = vmul.f32 %v523, 0.5
        %v540 = vmul.f32 %v524, 0.5
        %v541 = vmul.f32 %v525, 0.5
        %v542 = vmul.f32 %v526, 0.5
        %v543 = vmul.f32 %v527, 0.5
        %v544 = vmul.f32 %v528, 0.5
        %v545 = vmul.f32 %v529, 0.5
        %v546 = vmul.f32 %v530, 0.5
        %v547 = vmul.f32 %v531, 0.5
        %v548 = vmul.f32 %v382, %v532
        %v549 = vmul.f32 %v384, %v533
        %v550 = vmul.f32 %v386, %v534
        %v551 = vmul.f32 %v388, %v535
        %v552 = vmul.f32 %v392, %v536
        %v553 = vmul.f32 %v394, %v537
        %v554 = vmul.f32 %v396, %v538
        %v555 = vmul.f32 %v398, %v539
        %v556 = vmul.f32 %v402, %v540
        %v557 = vmul.f32 %v404, %v541
        %v558 = vmul.f32 %v406, %v542
        %v559 = vmul.f32 %v408, %v543
        %v560 = vmul.f32 %v412, %v544
        %v561 = vmul.f32 %v414, %v545
        %v562 = vmul.f32 %v416, %v546
        %v563 = vmul.f32 %v418, %v547
        %v564 = vpack.c.bf16 %v550, %v548
        %v565 = vpack.c.bf16 %v551, %v549
        %v566 = vpack.c.bf16 %v554, %v552
        %v567 = vpack.c.bf16 %v555, %v553
        %v568 = vpack.c.bf16 %v558, %v556
        %v569 = vpack.c.bf16 %v559, %v557
        %v570 = vpack.c.bf16 %v562, %v560
        %v571 = vpack.c.bf16 %v563, %v561
        %v572 = vld [vmem:[%s3] sm:$0xf]
        %v573 = vld [vmem:[%s3 + $0x4] sm:$0xf]
        %v574 = vld [vmem:[%s3 + $0x8] sm:$0xf]
        %v575 = vld [vmem:[%s3 + $0xc] sm:$0xf]
        %v576 = vld [vmem:[%s3 + $0x10] sm:$0xf]
        %v577 = vld [vmem:[%s3 + $0x14] sm:$0xf]
        %v578 = vld [vmem:[%s3 + $0x18] sm:$0xf]
        %v579 = vld [vmem:[%s3 + $0x1c] sm:$0xf]
        %v580 = vld [vmem:[%s3 + $0x20] sm:$0xf]
        %v581 = vld [vmem:[%s3 + $0x24] sm:$0xf]
        %v582 = vld [vmem:[%s3 + $0x28] sm:$0xf]
        %v583 = vld [vmem:[%s3 + $0x2c] sm:$0xf]
        %v584 = vld [vmem:[%s3 + $0x30] sm:$0xf]
        %v585 = vld [vmem:[%s3 + $0x34] sm:$0xf]
        %v586 = vld [vmem:[%s3 + $0x38] sm:$0xf]
        %v587 = vld [vmem:[%s3 + $0x3c] sm:$0xf]
        %v588 = vld [vmem:[%s3 + $0x40] sm:$0xf]
        %v589 = vld [vmem:[%s3 + $0x44] sm:$0xf]
        %v590 = vld [vmem:[%s3 + $0x48] sm:$0xf]
        %v591 = vld [vmem:[%s3 + $0x4c] sm:$0xf]
        %v592 = vld [vmem:[%s3 + $0x50] sm:$0xf]
        %v593 = vld [vmem:[%s3 + $0x54] sm:$0xf]
        %v594 = vld [vmem:[%s3 + $0x58] sm:$0xf]
        %v595 = vld [vmem:[%s3 + $0x5c] sm:$0xf]
        %v596 = vld [vmem:[%s3 + $0x60] sm:$0xf]
        %v597 = vld [vmem:[%s3 + $0x64] sm:$0xf]
        %v598 = vld [vmem:[%s3 + $0x68] sm:$0xf]
        %v599 = vld [vmem:[%s3 + $0x6c] sm:$0xf]
        %v600 = vld [vmem:[%s3 + $0x70] sm:$0xf]
        %v601 = vld [vmem:[%s3 + $0x74] sm:$0xf]
        %v602 = vld [vmem:[%s3 + $0x78] sm:$0xf]
        %v603 = vld [vmem:[%s3 + $0x7c] sm:$0xf]
        %v604 = vld [vmem:[%s4] sm:$0x1]
        %v606 = vlaneseq
        %v607 = vshrl.u32 %v606, 7
        %v608 = vsub.s32 0, %v607
        %v609 = vrot.slane %v604, %v608
        %v643 = vunpack.c.l.b16 %v572
        %v644 = vunpack.c.l.b16 %v573
        %v645 = vunpack.c.l.b16 %v574
        %v646 = vunpack.c.l.b16 %v575
        %v647 = vunpack.c.l.b16 %v576
        %v648 = vunpack.c.l.b16 %v577
        %v649 = vunpack.c.l.b16 %v578
        %v650 = vunpack.c.l.b16 %v579
        %v651 = vunpack.c.l.b16 %v580
        %v652 = vunpack.c.l.b16 %v581
        %v653 = vunpack.c.l.b16 %v582
        %v654 = vunpack.c.l.b16 %v583
        %v655 = vunpack.c.l.b16 %v584
        %v656 = vunpack.c.l.b16 %v585
        %v657 = vunpack.c.l.b16 %v586
        %v658 = vunpack.c.l.b16 %v587
        %v659 = vunpack.c.l.b16 %v588
        %v660 = vunpack.c.l.b16 %v589
        %v661 = vunpack.c.l.b16 %v590
        %v662 = vunpack.c.l.b16 %v591
        %v663 = vunpack.c.l.b16 %v592
        %v664 = vunpack.c.l.b16 %v593
        %v665 = vunpack.c.l.b16 %v594
        %v666 = vunpack.c.l.b16 %v595
        %v667 = vunpack.c.l.b16 %v596
        %v668 = vunpack.c.l.b16 %v597
        %v669 = vunpack.c.l.b16 %v598
        %v670 = vunpack.c.l.b16 %v599
        %v671 = vunpack.c.l.b16 %v600
        %v672 = vunpack.c.l.b16 %v601
        %v673 = vunpack.c.l.b16 %v602
        %v674 = vunpack.c.l.b16 %v603
        %v675 = vpack.c.b16 %v644, %v643
        %v676 = vpack.c.b16 %v646, %v645
        %v677 = vpack.c.b16 %v648, %v647
        %v678 = vpack.c.b16 %v650, %v649
        %v679 = vpack.c.b16 %v652, %v651
        %v680 = vpack.c.b16 %v654, %v653
        %v681 = vpack.c.b16 %v656, %v655
        %v682 = vpack.c.b16 %v658, %v657
        %v683 = vpack.c.b16 %v660, %v659
        %v684 = vpack.c.b16 %v662, %v661
        %v685 = vpack.c.b16 %v664, %v663
        %v686 = vpack.c.b16 %v666, %v665
        %v687 = vpack.c.b16 %v668, %v667
        %v688 = vpack.c.b16 %v670, %v669
        %v689 = vpack.c.b16 %v672, %v671
        %v690 = vpack.c.b16 %v674, %v673
        %707 = vmatprep.subr.bf16.mxu0 0
        %708 = vmatpush1.bf16.msra.mxu0 %v675
        %709 = vmatprep.subr.bf16.mxu0 0
        %710 = vmatpush1.bf16.msra.mxu0 %v676
        %711 = vmatprep.subr.bf16.mxu0 0
        %712 = vmatpush1.bf16.msra.mxu0 %v677
        %713 = vmatprep.subr.bf16.mxu0 0
        %714 = vmatpush1.bf16.msra.mxu0 %v678
        %715 = vmatprep.subr.bf16.mxu0 0
        %716 = vmatpush1.bf16.msra.mxu0 %v679
        %717 = vmatprep.subr.bf16.mxu0 0
        %718 = vmatpush1.bf16.msra.mxu0 %v680
        %719 = vmatprep.subr.bf16.mxu0 0
        %720 = vmatpush1.bf16.msra.mxu0 %v681
        %721 = vmatprep.subr.bf16.mxu0 0
        %722 = vmatpush1.bf16.msra.mxu0 %v682
        %723 = vmatprep.subr.bf16.mxu0 0
        %724 = vmatpush1.bf16.msra.mxu0 %v683
        %725 = vmatprep.subr.bf16.mxu0 0
        %726 = vmatpush1.bf16.msra.mxu0 %v684
        %727 = vmatprep.subr.bf16.mxu0 0
        %728 = vmatpush1.bf16.msra.mxu0 %v685
        %729 = vmatprep.subr.bf16.mxu0 0
        %730 = vmatpush1.bf16.msra.mxu0 %v686
        %731 = vmatprep.subr.bf16.mxu0 0
        %732 = vmatpush1.bf16.msra.mxu0 %v687
        %733 = vmatprep.subr.bf16.mxu0 0
        %734 = vmatpush1.bf16.msra.mxu0 %v688
        %735 = vmatprep.subr.bf16.mxu0 0
        %736 = vmatpush1.bf16.msra.mxu0 %v689
        %737 = vmatprep.subr.bf16.mxu0 0
        %738 = vmatpush1.bf16.msra.mxu0 %v690
        %739 = vmatprep.mubr.bf16.mxu0 %v565
        %740 = vmatmul.mubr.bf16.gmra.mrb[0].mxu0 %v564
        %v741 = vpop.f32.mrb[0].mxu0
        %v742 = vadd.f32 %v609, %v741
        %v743 = vpop.f32.mrb[0].mxu0
        %v744 = vpop.f32.mrb[0].mxu0
        %v745 = vadd.f32 %v609, %v744
        %v746 = vpop.f32.mrb[0].mxu0
        %747 = vmatprep.mubr.bf16.mxu0 %v567
        %748 = vmatmul.mubr.bf16.gmra.mrb[0].mxu0 %v566
        %v749 = vpop.f32.mrb[0].mxu0
        %v750 = vadd.f32 %v609, %v749
        %v751 = vpop.f32.mrb[0].mxu0
        %v752 = vpop.f32.mrb[0].mxu0
        %v753 = vadd.f32 %v609, %v752
        %v754 = vpop.f32.mrb[0].mxu0
        %755 = vmatprep.mubr.bf16.mxu0 %v569
        %756 = vmatmul.mubr.bf16.gmra.mrb[0].mxu0 %v568
        %v757 = vpop.f32.mrb[0].mxu0
        %v758 = vadd.f32 %v609, %v757
        %v759 = vpop.f32.mrb[0].mxu0
        %v760 = vpop.f32.mrb[0].mxu0
        %v761 = vadd.f32 %v609, %v760
        %v762 = vpop.f32.mrb[0].mxu0
        %763 = vmatprep.mubr.bf16.mxu0 %v571
        %764 = vmatmul.mubr.bf16.gmra.mrb[0].mxu0 %v570
        %v765 = vpop.f32.mrb[0].mxu0
        %v766 = vadd.f32 %v609, %v765
        %v767 = vpop.f32.mrb[0].mxu0
        %v768 = vpop.f32.mrb[0].mxu0
        %v769 = vadd.f32 %v609, %v768
        %v770 = vpop.f32.mrb[0].mxu0
        %771 = vdwg.mxu0
        %772 = vst [vmem:[%s218] sm:$0xff] %v742
        %773 = vst [vmem:[%s218 + $0x8] sm:$0xff] %v745
        %774 = vst [vmem:[%s218 + $0x10] sm:$0xff] %v750
        %775 = vst [vmem:[%s218 + $0x18] sm:$0xff] %v753
        %776 = vst [vmem:[%s218 + $0x20] sm:$0xff] %v758
        %777 = vst [vmem:[%s218 + $0x28] sm:$0xff] %v761
        %778 = vst [vmem:[%s218 + $0x30] sm:$0xff] %v766
        %779 = vst [vmem:[%s218 + $0x38] sm:$0xff] %v769
        %s780 = sand.u32 %s137, 1
        %s781 = scalar_lea.sflag [#allocation3], %s780
        %s782 = sand.u32 %s137, 1
        %s783 = smul.addr %s782, 64
        %s784 = scalar_lea.vmem [#allocation2], %s783
        // Predicated region
        $region41: #{chunk_feedforward.1} parent=39 // pred_check
          %p785 = pneg %p147
        $region42: #{chunk_feedforward.1} parent=39 // pred_check_branch
          %787 = sbr.rel (%p785) target = $region44
        $region43: #{chunk_feedforward.1} parent=39 // pred_region
          %s788 = smul.u32 8, %s19
          %s790 = ssub.s32 1024, 1024
          %791 = vsyncadd %s781, %s790
          %s792 = smul.addr %s788, 128
          %s793 = scalar_lea.hbm %s5, %s792
          %s794 = sshll.u32 %s784, 4
          %s795 = int_to_ptr.vmem [resolvable:$true] %s794
          %800 = dma.vmem_to_hbm [thread:$0]  %s795, 1024, %s793, %s781, 128, 128, 8
        $region44: #{chunk_feedforward.1} parent=39 // pred_fallthru
          _
      $region40: #{chunk_feedforward.1} parent=5 // pred_fallthru
        _
      %p801 = scmp.le.s32.totalorder 2, %s14
      // Predicated region
      $region45: #{chunk_feedforward.1} parent=5 // pred_check
        %p802 = pneg %p801
      $region46: #{chunk_feedforward.1} parent=5 // pred_check_branch
        %804 = sbr.rel (%p802) target = $region48
      $region47: #{chunk_feedforward.1} parent=5 // pred_region
        %s805 = ssub.s32 %s14, 2
        // Predicated region
        $region49: #{chunk_feedforward.1} parent=47 // pred_check
          %p806 = pneg %p153
        $region50: #{chunk_feedforward.1} parent=47 // pred_check_branch
          %808 = sbr.rel (%p806) target = $region52
        $region51: #{chunk_feedforward.1} parent=47 // pred_region
          %s809 = sand.u32 %s138, 1
          %s810 = scalar_lea.sflag [#allocation3], %s809
          %s811 = sand.u32 %s138, 1
          %s812 = smul.addr %s811, 64
          %s813 = scalar_lea.vmem [#allocation2], %s812
          %814 = dma.done %s810, 1024
        $region52: #{chunk_feedforward.1} parent=47 // pred_fallthru
          _
      $region48: #{chunk_feedforward.1} parent=5 // pred_fallthru
        _
    $region6: #{chunk_feedforward.1} parent=1 // loop_footer
      %s18 = sadd.s32 1, %s14
    $region7: #{chunk_feedforward.1} parent=1 // loop_footer_branch
      %13 = sbr.rel target = $region3
    $region8: #{chunk_feedforward.1} parent=1 // loop_exit
      _
    %815 = vsyncpa [#allocation3], 1
    %s816 = scalar_lea.sflag [#allocation3], 1
    %817 = vsyncpa %s816, 1

</llo_original>
